<compile_context>
chip_gen: v7x
topology: tpu7x:2x2x1
jax: 0.10.0
libtpu: 0.0.40
codegen_flags: <defaults>
</compile_context>

<pallas_src>
import functools

import jax
import jax.numpy as jnp
from jax import lax
from jax.experimental import pallas as pl
from jax.experimental.pallas import tpu as pltpu


def _conv_normal_kernel(x_ref, mask_ref, w1_ref, s1_ref, b1_ref,
                        w2_ref, s2_ref, b2_ref, o_ref, slab_ref,
                        *, Wp, R, n_inner, b_tile):
    # x_ref   : (b_tile, Cin, Hp*Wp) bf16  zero-padded images, channels on
    #                                      sublanes, flat padded spatial on lanes
    # mask_ref: (1, Hp*Wp)           f32   1.0 on interior pixels, 0.0 on halo
    # w1_ref  : (nInner, Cin)        bf16  1x1 bottleneck conv
    # s1, b1  : (nInner, 1)          f32   folded BatchNorm1 scale / shift
    # w2_ref  : (nOut, 9*nInner)     bf16  3x3 conv, taps flattened into K
    # s2, b2  : (nOut, 1)            f32   folded BatchNorm2 scale / shift
    # o_ref   : (b_tile, nOut, R)    f32   R = Hp*Wp - 2*(Wp+1) flat rows
    # slab_ref: (9*nInner, R)        bf16  im2col slab scratch (reused per image)
    mask = mask_ref[...]
    w1 = w1_ref[...]
    w2 = w2_ref[...]
    s1 = s1_ref[...]
    b1 = b1_ref[...]
    s2 = s2_ref[...]
    b2 = b2_ref[...]

    for b in range(b_tile):
        # Stage 1: 1x1 conv (MXU, bf16 in / f32 acc) + folded BN + ReLU in f32.
        # The mask re-zeroes the halo ring so stage 2 sees exact zero padding.
        h = jnp.dot(w1, x_ref[b], preferred_element_type=jnp.float32)
        h = jnp.maximum(h * s1 + b1, 0.0) * mask

        # Build the im2col slab: tap (dy, dx) of the 3x3 conv is the flat-grid
        # shift dy*Wp+dx of h.  Stacking the nine shifted copies along the
        # channel (sublane) axis turns stage 2 into a single K=9*nInner matmul.
        for dy in range(3):
            for dx in range(3):
                t = dy * 3 + dx
                off = dy * Wp + dx
                slab_ref[t * n_inner:(t + 1) * n_inner, :] = (
                    h[:, off:off + R].astype(jnp.bfloat16))

        # Stage 2: 3x3 conv as ONE MXU matmul + folded BN + ReLU (f32 epilogue).
        acc = jnp.dot(w2, slab_ref[...], preferred_element_type=jnp.float32)
        o_ref[b] = jnp.maximum(acc * s2 + b2, 0.0)


def _pick_batch_tile(n):
    """Largest divisor of n (capped at 8) that still leaves >= 2 grid steps
    (so both v7x TensorCores get work); falls back to 1."""
    best = 1
    for t in range(1, min(8, n) + 1):
        if n % t == 0 and n // t >= 2:
            best = t
    return best


def conv_normal_forward(x, w1, bn1, w2, bn2, eps=1e-5):
    """ConvNormal.forward (bottleneck=True, eval-mode BN).

    x   : (N, Cin, H, W) NCHW array, or a list thereof (x[0] is used).
    w1  : (nInner, Cin, 1, 1)  bias-free 1x1 conv weight
    bn1 : (gamma, beta, running_mean, running_var), each (nInner,)
    w2  : (nOut, nInner, 3, 3) bias-free 3x3 conv weight
    bn2 : (gamma, beta, running_mean, running_var), each (nOut,)
    returns (N, Cin + nOut, H, W) float32
    """
    if isinstance(x, (list, tuple)):
        x = x[0]
    x = x.astype(jnp.float32)
    N, Cin, H, W = x.shape
    Hp, Wp = H + 2, W + 2
    HpWp = Hp * Wp
    R = HpWp - 2 * (Wp + 1)
    nInner = w1.shape[0]
    nOut = w2.shape[0]
    b_tile = _pick_batch_tile(N)

    # NCHW stays NCHW: zero-pad the spatial dims, flatten them onto the lane
    # axis, and stream the activations as bf16 (f32 accumulation in-kernel).
    x_pad = jnp.pad(x, ((0, 0), (0, 0), (1, 1), (1, 1)))
    x_flat = x_pad.reshape(N, Cin, HpWp).astype(jnp.bfloat16)

    # Lane-dense interior mask: zero on the one-pixel halo ring.
    mask = jnp.pad(jnp.ones((H, W), jnp.float32),
                   ((1, 1), (1, 1))).reshape(1, HpWp)

    # Fold both BatchNorms into per-channel scale/shift (eval-mode stats), f32.
    g1, be1, m1, v1 = bn1
    g2, be2, m2, v2 = bn2
    s1 = (g1 / jnp.sqrt(v1 + eps)).astype(jnp.float32)
    b1 = (be1 - m1 * s1).astype(jnp.float32)
    s2 = (g2 / jnp.sqrt(v2 + eps)).astype(jnp.float32)
    b2 = (be2 - m2 * s2).astype(jnp.float32)

    w1_t = w1[:, :, 0, 0].astype(jnp.bfloat16)                     # (nInner, Cin)
    # (nOut, nInner, 3, 3) -> (nOut, 3, 3, nInner) -> (nOut, 9*nInner); column
    # (dy*3+dx)*nInner + c matches the slab layout built inside the kernel.
    w2_t = jnp.transpose(w2, (0, 2, 3, 1)).reshape(nOut, 9 * nInner)
    w2_t = w2_t.astype(jnp.bfloat16)

    kernel = functools.partial(_conv_normal_kernel, Wp=Wp, R=R,
                               n_inner=nInner, b_tile=b_tile)

    y_rows = pl.pallas_call(
        kernel,
        out_shape=jax.ShapeDtypeStruct((N, nOut, R), jnp.float32),
        grid=(N // b_tile,),
        in_specs=[
            pl.BlockSpec((b_tile, Cin, HpWp), lambda n: (n, 0, 0)),
            pl.BlockSpec((1, HpWp), lambda n: (0, 0)),
            pl.BlockSpec((nInner, Cin), lambda n: (0, 0)),
            pl.BlockSpec((nInner, 1), lambda n: (0, 0)),
            pl.BlockSpec((nInner, 1), lambda n: (0, 0)),
            pl.BlockSpec((nOut, 9 * nInner), lambda n: (0, 0)),
            pl.BlockSpec((nOut, 1), lambda n: (0, 0)),
            pl.BlockSpec((nOut, 1), lambda n: (0, 0)),
        ],
        out_specs=pl.BlockSpec((b_tile, nOut, R), lambda n: (n, 0, 0)),
        scratch_shapes=[pltpu.VMEM((9 * nInner, R), jnp.bfloat16)],
        compiler_params=pltpu.CompilerParams(
            dimension_semantics=("parallel",),
            vmem_limit_bytes=48 * 1024 * 1024),
    )(x_flat, mask, w1_t, s1.reshape(nInner, 1), b1.reshape(nInner, 1),
      w2_t, s2.reshape(nOut, 1), b2.reshape(nOut, 1))

    # Scatter the R computed rows back onto the padded grid, crop the halo
    # (still NCHW -> no transposes), then the module's torch.cat on channels.
    y_full = jnp.pad(y_rows, ((0, 0), (0, 0), (Wp + 1, Wp + 1)))
    y = y_full.reshape(N, nOut, Hp, Wp)[:, :, 1:H + 1, 1:W + 1]
    return jnp.concatenate([x, y], axis=1)


def _reference(x, w1, bn1, w2, bn2, eps=1e-5):
    """Pure-JAX ConvNormal forward (bottleneck=True, eval-mode BN), mirroring
    the kernel's bf16 streaming (x/w1/w2/intermediate h rounded to bf16) so the
    correctness check stays tight while the compute path is independent."""
    xq = x.astype(jnp.bfloat16).astype(jnp.float32)
    w1q = w1.astype(jnp.bfloat16).astype(jnp.float32)
    w2q = w2.astype(jnp.bfloat16).astype(jnp.float32)
    g1, be1, m1, v1 = bn1
    g2, be2, m2, v2 = bn2
    s1 = g1 / jnp.sqrt(v1 + eps)
    b1 = be1 - m1 * s1
    s2 = g2 / jnp.sqrt(v2 + eps)
    b2 = be2 - m2 * s2
    dn = ('NCHW', 'OIHW', 'NCHW')
    hp = lax.Precision.HIGHEST
    h = lax.conv_general_dilated(xq, w1q, (1, 1), 'VALID',
                                 dimension_numbers=dn, precision=hp)
    h = jnp.maximum(h * s1[None, :, None, None] + b1[None, :, None, None], 0.0)
    h = h.astype(jnp.bfloat16).astype(jnp.float32)
    y = lax.conv_general_dilated(h, w2q, (1, 1), ((1, 1), (1, 1)),
                                 dimension_numbers=dn, precision=hp)
    y = jnp.maximum(y * s2[None, :, None, None] + b2[None, :, None, None], 0.0)
    return jnp.concatenate([x, y], axis=1)


if __name__ == "__main__":
    key = jax.random.PRNGKey(0)
    ks = jax.random.split(key, 11)

    batch, nIn, spatial = 2, 8, 16
    nOut, bnWidth = 16, 2
    nInner = min(nIn, bnWidth * nOut)     # bottleneck inner width

    x = jax.random.normal(ks[0], (batch, nIn, spatial, spatial), jnp.float32)

    w1 = jax.random.normal(ks[1], (nInner, nIn, 1, 1), jnp.float32) \
        * (2.0 / nIn) ** 0.5
    w2 = jax.random.normal(ks[2], (nOut, nInner, 3, 3), jnp.float32) \
        * (2.0 / (9 * nInner)) ** 0.5

    bn1 = (jax.random.uniform(ks[3], (nInner,), minval=0.5, maxval=1.5),
           0.1 * jax.random.normal(ks[4], (nInner,)),
           0.1 * jax.random.normal(ks[5], (nInner,)),
           jax.random.uniform(ks[6], (nInner,), minval=0.5, maxval=1.5))
    bn2 = (jax.random.uniform(ks[7], (nOut,), minval=0.5, maxval=1.5),
           0.1 * jax.random.normal(ks[8], (nOut,)),
           0.1 * jax.random.normal(ks[9], (nOut,)),
           jax.random.uniform(ks[10], (nOut,), minval=0.5, maxval=1.5))

    # ConvNormal.forward also accepts a list input (it uses x[0]).
    out = conv_normal_forward([x], w1, bn1, w2, bn2)
    out = jax.block_until_ready(out)

    ref = _reference(x, w1, bn1, w2, bn2)
    assert out.shape == (batch, nIn + nOut, spatial, spatial), out.shape
    max_err = float(jnp.max(jnp.abs(out - ref)))
    assert jnp.allclose(out, ref, atol=5e-3, rtol=5e-3), f"mismatch: {max_err}"

    print("KERNEL_OK")
</pallas_src>

<mosaic_0001>
module attributes {stable_mosaic.version = 11 : i64} {
  func.func @_conv_normal_kernel(%arg0: i32, %arg1: memref<1x8x324xbf16, #tpu.memory_space<vmem>>, %arg2: memref<1x324xf32, #tpu.memory_space<vmem>>, %arg3: memref<8x8xbf16, #tpu.memory_space<vmem>>, %arg4: memref<8x1xf32, #tpu.memory_space<vmem>>, %arg5: memref<8x1xf32, #tpu.memory_space<vmem>>, %arg6: memref<16x72xbf16, #tpu.memory_space<vmem>>, %arg7: memref<16x1xf32, #tpu.memory_space<vmem>>, %arg8: memref<16x1xf32, #tpu.memory_space<vmem>>, %arg9: memref<1x16x286xf32, #tpu.memory_space<vmem>>, %arg10: memref<72x286xbf16, #tpu.memory_space<vmem>>) attributes {dimension_semantics = [#tpu.dimension_semantics<parallel>], iteration_bounds = array<i64: 2>, scalar_prefetch = 0 : i64, scratch_operands = 1 : i64, tpu.core_type = #tpu.core_type<tc>, window_params = [{transform_indices = @transform_0, window_bounds = array<i64: 1, 8, 324>}, {pipeline_mode = #tpu.pipeline_mode<synchronous>, transform_indices = @transform_1, window_bounds = array<i64: 1, 324>}, {pipeline_mode = #tpu.pipeline_mode<synchronous>, transform_indices = @transform_2, window_bounds = array<i64: 8, 8>}, {pipeline_mode = #tpu.pipeline_mode<synchronous>, transform_indices = @transform_3, window_bounds = array<i64: 8, 1>}, {pipeline_mode = #tpu.pipeline_mode<synchronous>, transform_indices = @transform_4, window_bounds = array<i64: 8, 1>}, {pipeline_mode = #tpu.pipeline_mode<synchronous>, transform_indices = @transform_5, window_bounds = array<i64: 16, 72>}, {pipeline_mode = #tpu.pipeline_mode<synchronous>, transform_indices = @transform_6, window_bounds = array<i64: 16, 1>}, {pipeline_mode = #tpu.pipeline_mode<synchronous>, transform_indices = @transform_7, window_bounds = array<i64: 16, 1>}, {transform_indices = @transform_8, window_bounds = array<i64: 1, 16, 286>}]} {
    %c0 = arith.constant 0 : index
    %c0_0 = arith.constant 0 : index
    %0 = vector.load %arg2[%c0, %c0_0] : memref<1x324xf32, #tpu.memory_space<vmem>>, vector<1x324xf32>
    %c0_1 = arith.constant 0 : index
    %c0_2 = arith.constant 0 : index
    %1 = vector.load %arg3[%c0_1, %c0_2] : memref<8x8xbf16, #tpu.memory_space<vmem>>, vector<8x8xbf16>
    %c0_3 = arith.constant 0 : index
    %c0_4 = arith.constant 0 : index
    %2 = vector.load %arg6[%c0_3, %c0_4] : memref<16x72xbf16, #tpu.memory_space<vmem>>, vector<16x72xbf16>
    %c0_5 = arith.constant 0 : index
    %c0_6 = arith.constant 0 : index
    %3 = vector.load %arg4[%c0_5, %c0_6] : memref<8x1xf32, #tpu.memory_space<vmem>>, vector<8x1xf32>
    %c0_7 = arith.constant 0 : index
    %c0_8 = arith.constant 0 : index
    %4 = vector.load %arg5[%c0_7, %c0_8] : memref<8x1xf32, #tpu.memory_space<vmem>>, vector<8x1xf32>
    %c0_9 = arith.constant 0 : index
    %c0_10 = arith.constant 0 : index
    %5 = vector.load %arg7[%c0_9, %c0_10] : memref<16x1xf32, #tpu.memory_space<vmem>>, vector<16x1xf32>
    %c0_11 = arith.constant 0 : index
    %c0_12 = arith.constant 0 : index
    %6 = vector.load %arg8[%c0_11, %c0_12] : memref<16x1xf32, #tpu.memory_space<vmem>>, vector<16x1xf32>
    %c0_13 = arith.constant 0 : index
    %c0_14 = arith.constant 0 : index
    %c0_15 = arith.constant 0 : index
    %7 = vector.load %arg1[%c0_13, %c0_14, %c0_15] : memref<1x8x324xbf16, #tpu.memory_space<vmem>>, vector<1x8x324xbf16>
    %8 = vector.shape_cast %7 : vector<1x8x324xbf16> to vector<8x324xbf16>
    %cst = arith.constant dense<0.000000e+00> : vector<8x324xf32>
    %9 = tpu.matmul %1, %8, %cst {dimension_numbers = #tpu.dot_dimension_numbers<[1], [0], [0], [1], [0, 0, 1, 1], [], []>} : vector<8x8xbf16>, vector<8x324xbf16>, vector<8x324xf32> -> vector<8x324xf32>
    %10 = vector.broadcast %3 : vector<8x1xf32> to vector<8x324xf32>
    %11 = arith.mulf %9, %10 : vector<8x324xf32>
    %12 = vector.broadcast %4 : vector<8x1xf32> to vector<8x324xf32>
    %13 = arith.addf %11, %12 : vector<8x324xf32>
    %cst_16 = arith.constant 0.000000e+00 : f32
    %14 = vector.broadcast %cst_16 : f32 to vector<8x324xf32>
    %15 = arith.maximumf %13, %14 : vector<8x324xf32>
    %16 = vector.broadcast %0 : vector<1x324xf32> to vector<8x324xf32>
    %17 = arith.mulf %15, %16 : vector<8x324xf32>
    %18 = vector.extract_strided_slice %17 {offsets = [0, 0], sizes = [8, 286], strides = [1, 1]} : vector<8x324xf32> to vector<8x286xf32>
    %19 = arith.truncf %18 : vector<8x286xf32> to vector<8x286xbf16>
    %c0_17 = arith.constant 0 : index
    %c0_18 = arith.constant 0 : index
    %20 = vector.load %arg10[%c0_17, %c0_18] : memref<72x286xbf16, #tpu.memory_space<vmem>>, vector<8x286xbf16>
    tpu.vector_store %arg10[%c0_17, %c0_18], %19 {strides = array<i32>} : memref<72x286xbf16, #tpu.memory_space<vmem>>, vector<8x286xbf16>,
    %21 = vector.extract_strided_slice %17 {offsets = [0, 1], sizes = [8, 286], strides = [1, 1]} : vector<8x324xf32> to vector<8x286xf32>
    %22 = arith.truncf %21 : vector<8x286xf32> to vector<8x286xbf16>
    %c8 = arith.constant 8 : index
    %c0_19 = arith.constant 0 : index
    %23 = vector.load %arg10[%c8, %c0_19] : memref<72x286xbf16, #tpu.memory_space<vmem>>, vector<8x286xbf16>
    tpu.vector_store %arg10[%c8, %c0_19], %22 {strides = array<i32>} : memref<72x286xbf16, #tpu.memory_space<vmem>>, vector<8x286xbf16>,
    %24 = vector.extract_strided_slice %17 {offsets = [0, 2], sizes = [8, 286], strides = [1, 1]} : vector<8x324xf32> to vector<8x286xf32>
    %25 = arith.truncf %24 : vector<8x286xf32> to vector<8x286xbf16>
    %c16 = arith.constant 16 : index
    %c0_20 = arith.constant 0 : index
    %26 = vector.load %arg10[%c16, %c0_20] : memref<72x286xbf16, #tpu.memory_space<vmem>>, vector<8x286xbf16>
    tpu.vector_store %arg10[%c16, %c0_20], %25 {strides = array<i32>} : memref<72x286xbf16, #tpu.memory_space<vmem>>, vector<8x286xbf16>,
    %27 = vector.extract_strided_slice %17 {offsets = [0, 18], sizes = [8, 286], strides = [1, 1]} : vector<8x324xf32> to vector<8x286xf32>
    %28 = arith.truncf %27 : vector<8x286xf32> to vector<8x286xbf16>
    %c24 = arith.constant 24 : index
    %c0_21 = arith.constant 0 : index
    %29 = vector.load %arg10[%c24, %c0_21] : memref<72x286xbf16, #tpu.memory_space<vmem>>, vector<8x286xbf16>
    tpu.vector_store %arg10[%c24, %c0_21], %28 {strides = array<i32>} : memref<72x286xbf16, #tpu.memory_space<vmem>>, vector<8x286xbf16>,
    %30 = vector.extract_strided_slice %17 {offsets = [0, 19], sizes = [8, 286], strides = [1, 1]} : vector<8x324xf32> to vector<8x286xf32>
    %31 = arith.truncf %30 : vector<8x286xf32> to vector<8x286xbf16>
    %c32 = arith.constant 32 : index
    %c0_22 = arith.constant 0 : index
    %32 = vector.load %arg10[%c32, %c0_22] : memref<72x286xbf16, #tpu.memory_space<vmem>>, vector<8x286xbf16>
    tpu.vector_store %arg10[%c32, %c0_22], %31 {strides = array<i32>} : memref<72x286xbf16, #tpu.memory_space<vmem>>, vector<8x286xbf16>,
    %33 = vector.extract_strided_slice %17 {offsets = [0, 20], sizes = [8, 286], strides = [1, 1]} : vector<8x324xf32> to vector<8x286xf32>
    %34 = arith.truncf %33 : vector<8x286xf32> to vector<8x286xbf16>
    %c40 = arith.constant 40 : index
    %c0_23 = arith.constant 0 : index
    %35 = vector.load %arg10[%c40, %c0_23] : memref<72x286xbf16, #tpu.memory_space<vmem>>, vector<8x286xbf16>
    tpu.vector_store %arg10[%c40, %c0_23], %34 {strides = array<i32>} : memref<72x286xbf16, #tpu.memory_space<vmem>>, vector<8x286xbf16>,
    %36 = vector.extract_strided_slice %17 {offsets = [0, 36], sizes = [8, 286], strides = [1, 1]} : vector<8x324xf32> to vector<8x286xf32>
    %37 = arith.truncf %36 : vector<8x286xf32> to vector<8x286xbf16>
    %c48 = arith.constant 48 : index
    %c0_24 = arith.constant 0 : index
    %38 = vector.load %arg10[%c48, %c0_24] : memref<72x286xbf16, #tpu.memory_space<vmem>>, vector<8x286xbf16>
    tpu.vector_store %arg10[%c48, %c0_24], %37 {strides = array<i32>} : memref<72x286xbf16, #tpu.memory_space<vmem>>, vector<8x286xbf16>,
    %39 = vector.extract_strided_slice %17 {offsets = [0, 37], sizes = [8, 286], strides = [1, 1]} : vector<8x324xf32> to vector<8x286xf32>
    %40 = arith.truncf %39 : vector<8x286xf32> to vector<8x286xbf16>
    %c56 = arith.constant 56 : index
    %c0_25 = arith.constant 0 : index
    %41 = vector.load %arg10[%c56, %c0_25] : memref<72x286xbf16, #tpu.memory_space<vmem>>, vector<8x286xbf16>
    tpu.vector_store %arg10[%c56, %c0_25], %40 {strides = array<i32>} : memref<72x286xbf16, #tpu.memory_space<vmem>>, vector<8x286xbf16>,
    %42 = vector.extract_strided_slice %17 {offsets = [0, 38], sizes = [8, 286], strides = [1, 1]} : vector<8x324xf32> to vector<8x286xf32>
    %43 = arith.truncf %42 : vector<8x286xf32> to vector<8x286xbf16>
    %c64 = arith.constant 64 : index
    %c0_26 = arith.constant 0 : index
    %44 = vector.load %arg10[%c64, %c0_26] : memref<72x286xbf16, #tpu.memory_space<vmem>>, vector<8x286xbf16>
    tpu.vector_store %arg10[%c64, %c0_26], %43 {strides = array<i32>} : memref<72x286xbf16, #tpu.memory_space<vmem>>, vector<8x286xbf16>,
    %c0_27 = arith.constant 0 : index
    %c0_28 = arith.constant 0 : index
    %45 = vector.load %arg10[%c0_27, %c0_28] : memref<72x286xbf16, #tpu.memory_space<vmem>>, vector<72x286xbf16>
    %cst_29 = arith.constant dense<0.000000e+00> : vector<16x286xf32>
    %46 = tpu.matmul %2, %45, %cst_29 {dimension_numbers = #tpu.dot_dimension_numbers<[1], [0], [0], [1], [0, 0, 1, 1], [], []>} : vector<16x72xbf16>, vector<72x286xbf16>, vector<16x286xf32> -> vector<16x286xf32>
    %47 = vector.broadcast %5 : vector<16x1xf32> to vector<16x286xf32>
    %48 = arith.mulf %46, %47 : vector<16x286xf32>
    %49 = vector.broadcast %6 : vector<16x1xf32> to vector<16x286xf32>
    %50 = arith.addf %48, %49 : vector<16x286xf32>
    %cst_30 = arith.constant 0.000000e+00 : f32
    %51 = vector.broadcast %cst_30 : f32 to vector<16x286xf32>
    %52 = arith.maximumf %50, %51 : vector<16x286xf32>
    %c0_31 = arith.constant 0 : index
    %c0_32 = arith.constant 0 : index
    %c0_33 = arith.constant 0 : index
    %53 = vector.load %arg9[%c0_31, %c0_32, %c0_33] : memref<1x16x286xf32, #tpu.memory_space<vmem>>, vector<1x16x286xf32>
    %54 = vector.shape_cast %53 : vector<1x16x286xf32> to vector<16x286xf32>
    %55 = vector.shape_cast %52 : vector<16x286xf32> to vector<1x16x286xf32>
    tpu.vector_store %arg9[%c0_31, %c0_32, %c0_33], %55 {strides = array<i32>} : memref<1x16x286xf32, #tpu.memory_space<vmem>>, vector<1x16x286xf32>,
    return
  }
  func.func @transform_0(%arg0: i32) -> (i32, i32, i32) {
    %c0_i32 = arith.constant 0 : i32
    %c0_i32_0 = arith.constant 0 : i32
    %c0_i32_1 = arith.constant 0 : i32
    return %arg0, %c0_i32, %c0_i32_0 : i32, i32, i32
  }
  func.func @transform_1(%arg0: i32) -> (i32, i32) {
    %c0_i32 = arith.constant 0 : i32
    %c0_i32_0 = arith.constant 0 : i32
    %c0_i32_1 = arith.constant 0 : i32
    return %c0_i32, %c0_i32_0 : i32, i32
  }
  func.func @transform_2(%arg0: i32) -> (i32, i32) {
    %c0_i32 = arith.constant 0 : i32
    %c0_i32_0 = arith.constant 0 : i32
    %c0_i32_1 = arith.constant 0 : i32
    return %c0_i32, %c0_i32_0 : i32, i32
  }
  func.func @transform_3(%arg0: i32) -> (i32, i32) {
    %c0_i32 = arith.constant 0 : i32
    %c0_i32_0 = arith.constant 0 : i32
    %c0_i32_1 = arith.constant 0 : i32
    return %c0_i32, %c0_i32_0 : i32, i32
  }
  func.func @transform_4(%arg0: i32) -> (i32, i32) {
    %c0_i32 = arith.constant 0 : i32
    %c0_i32_0 = arith.constant 0 : i32
    %c0_i32_1 = arith.constant 0 : i32
    return %c0_i32, %c0_i32_0 : i32, i32
  }
  func.func @transform_5(%arg0: i32) -> (i32, i32) {
    %c0_i32 = arith.constant 0 : i32
    %c0_i32_0 = arith.constant 0 : i32
    %c0_i32_1 = arith.constant 0 : i32
    return %c0_i32, %c0_i32_0 : i32, i32
  }
  func.func @transform_6(%arg0: i32) -> (i32, i32) {
    %c0_i32 = arith.constant 0 : i32
    %c0_i32_0 = arith.constant 0 : i32
    %c0_i32_1 = arith.constant 0 : i32
    return %c0_i32, %c0_i32_0 : i32, i32
  }
  func.func @transform_7(%arg0: i32) -> (i32, i32) {
    %c0_i32 = arith.constant 0 : i32
    %c0_i32_0 = arith.constant 0 : i32
    %c0_i32_1 = arith.constant 0 : i32
    return %c0_i32, %c0_i32_0 : i32, i32
  }
  func.func @transform_8(%arg0: i32) -> (i32, i32, i32) {
    %c0_i32 = arith.constant 0 : i32
    %c0_i32_0 = arith.constant 0 : i32
    %c0_i32_1 = arith.constant 0 : i32
    return %arg0, %c0_i32, %c0_i32_0 : i32, i32, i32
  }
}

</mosaic_0001>

<llo_original>
// kernel: tpu_custom_call.1
$region0: #{tpu_custom_call.1}
  #allocation0 [shape = 'u32[]', space=smem, size = 0x4, offset = 0x4, fixed_abs, tag = 'smem constant byte address 0x4 - core index']
  #allocation1 [shape = 'u32[144,128]{1,0:T(1,128)}', space=vmem, size = 0x12000, scoped, tag = 'internal scratch']
  #allocation2 [shape = 'bf16[72,286]{1,0:T(8,128)(2,1)}', space=vmem, size = 0xd800, scoped, tag = 'scratch operand']
  %s0 = inlined_call_operand.vmem [shape: bf16[2,8,324], index: 0, kind: input, shape index: {}]
  %s1 = inlined_call_operand.vmem [shape: f32[1,324], index: 1, kind: input, shape index: {}]
  %s2 = inlined_call_operand.vmem [shape: bf16[8,8], index: 2, kind: input, shape index: {}]
  %s3 = inlined_call_operand.vmem [shape: f32[8,1], index: 3, kind: input, shape index: {}]
  %s4 = inlined_call_operand.vmem [shape: f32[8,1], index: 4, kind: input, shape index: {}]
  %s5 = inlined_call_operand.vmem [shape: bf16[16,72], index: 5, kind: input, shape index: {}]
  %s6 = inlined_call_operand.vmem [shape: f32[16,1], index: 6, kind: input, shape index: {}]
  %s7 = inlined_call_operand.vmem [shape: f32[16,1], index: 7, kind: input, shape index: {}]
  %s8 = inlined_call_operand.hbm [shape: f32[2,16,286], index: 8, kind: output, shape index: {}]
  %s9 = sld [smem:[#allocation0]]
  $region65: #{tpu_custom_call.1} parent=0
    _
  %s11 = ssub.s32 1, %s9
  %s12 = scalar_select 0, %s11, %s9
  $region1: #{tpu_custom_call.1} parent=0
    #allocation3 [shape = 'u8[49152]{0}', space=vmem, size = 0xc000, scoped, tag = 'output window, operand 0']
    #allocation4 [shape = 's32[2]{0}', space=sflag, size = 0x8, scoped, tag = 'scoped memory for tpu_custom_call.1']
    %13 = vsyncpa [#allocation4], 0
    %s14 = scalar_lea.sflag [#allocation4], 1
    %15 = vsyncpa %s14, 0
    loop: start=0, step=1, limit=4
    $region2: #{tpu_custom_call.1} parent=1 // loop_pre_header
      _
    $region3: #{tpu_custom_call.1} parent=1 // loop_header
      %s17 = sphi 0, %s21
      %p18 = scmp.ge.s32.totalorder %s17, 4
      %s27 = sphi 0, %s29
      %s30 = sphi 0, %s27
      %s31 = sphi 0, %s30
      %s47 = sphi 0, %s31
      %s51 = sphi 0, %s51
      %s53 = sphi 0, %s51
      %s54 = sphi 0, %s53
      %s68 = sphi 0, %s54
      %s72 = sphi 0, %s72
      %s74 = sphi 0, %s72
      %s75 = sphi 0, %s74
      %s89 = sphi 0, %s75
      %s93 = sphi 0, %s93
      %s95 = sphi 0, %s93
      %s96 = sphi 0, %s95
      %s110 = sphi 0, %s96
      %s114 = sphi 0, %s114
      %s116 = sphi 0, %s114
      %s117 = sphi 0, %s116
      %s131 = sphi 0, %s117
      %s135 = sphi 0, %s135
      %s137 = sphi 0, %s135
      %s138 = sphi 0, %s137
      %s152 = sphi 0, %s138
      %s156 = sphi 0, %s156
      %s158 = sphi 0, %s156
      %s159 = sphi 0, %s158
      %s173 = sphi 0, %s159
      %s177 = sphi 0, %s177
      %s179 = sphi 0, %s177
      %s180 = sphi 0, %s179
      %s194 = sphi 0, %s180
      %s200 = sphi 0, %s202
      %s203 = sphi 0, %s200
      %s204 = sphi 0, %s203
      %s220 = sphi 0, %s204
    $region4: #{tpu_custom_call.1} parent=1 // loop_header_branch
      %20 = sbr.rel (%p18) target = $region8
    $region5: #{tpu_custom_call.1} parent=1 // loop_body
      %s22 = ssub.s32 %s17, 1
      %s23 = ssub.s32 %s17, 2
      %s24 = sadd.s32 %s17, 1
      %s25 = ssub.s32 %s17, %s24
      %p26 = scmp.eq.s32.totalorder %s25, 0
      %s28 = sadd.s32 %s27, 1
      %s29 = scalar_select %p26, %s27, %s28
      %p32 = pneg %p26
      %p33 = scmp.eq.s32.totalorder %s17, 1
      %p34 = por %p32, %p33
      %p35 = scmp.ne.s32.totalorder %s27, %s30
      %p36 = scmp.eq.s32.totalorder %s17, 0
      %p37 = por %p35, %p36
      %p38 = scmp.ne.s32.totalorder %s27, %s30
      %p39 = scmp.eq.s32.totalorder %s22, 1
      %p40 = por %p38, %p39
      %p41 = scmp.ne.s32.totalorder %s30, %s31
      %p42 = scmp.eq.s32.totalorder %s22, 0
      %p43 = por %p41, %p42
      %p44 = scmp.ne.s32.totalorder %s30, %s31
      %p45 = scmp.eq.s32.totalorder %s23, 1
      %p46 = por %p44, %p45
      %p48 = scmp.ne.s32.totalorder %s31, %s47
      %p49 = scmp.eq.s32.totalorder %s23, 0
      %p50 = por %p48, %p49
      %s52 = sadd.s32 %s51, 1
      %p55 = scmp.eq.s32.totalorder %s17, 1
      %p56 = scmp.ne.s32.totalorder %s51, %s53
      %p57 = scmp.eq.s32.totalorder %s17, 0
      %p58 = por %p56, %p57
      %p59 = scmp.ne.s32.totalorder %s51, %s53
      %p60 = scmp.eq.s32.totalorder %s22, 1
      %p61 = por %p59, %p60
      %p62 = scmp.ne.s32.totalorder %s53, %s54
      %p63 = scmp.eq.s32.totalorder %s22, 0
      %p64 = por %p62, %p63
      %p65 = scmp.ne.s32.totalorder %s53, %s54
      %p66 = scmp.eq.s32.totalorder %s23, 1
      %p67 = por %p65, %p66
      %p69 = scmp.ne.s32.totalorder %s54, %s68
      %p70 = scmp.eq.s32.totalorder %s23, 0
      %p71 = por %p69, %p70
      %s73 = sadd.s32 %s72, 1
      %p76 = scmp.eq.s32.totalorder %s17, 1
      %p77 = scmp.ne.s32.totalorder %s72, %s74
      %p78 = scmp.eq.s32.totalorder %s17, 0
      %p79 = por %p77, %p78
      %p80 = scmp.ne.s32.totalorder %s72, %s74
      %p81 = scmp.eq.s32.totalorder %s22, 1
      %p82 = por %p80, %p81
      %p83 = scmp.ne.s32.totalorder %s74, %s75
      %p84 = scmp.eq.s32.totalorder %s22, 0
      %p85 = por %p83, %p84
      %p86 = scmp.ne.s32.totalorder %s74, %s75
      %p87 = scmp.eq.s32.totalorder %s23, 1
      %p88 = por %p86, %p87
      %p90 = scmp.ne.s32.totalorder %s75, %s89
      %p91 = scmp.eq.s32.totalorder %s23, 0
      %p92 = por %p90, %p91
      %s94 = sadd.s32 %s93, 1
      %p97 = scmp.eq.s32.totalorder %s17, 1
      %p98 = scmp.ne.s32.totalorder %s93, %s95
      %p99 = scmp.eq.s32.totalorder %s17, 0
      %p100 = por %p98, %p99
      %p101 = scmp.ne.s32.totalorder %s93, %s95
      %p102 = scmp.eq.s32.totalorder %s22, 1
      %p103 = por %p101, %p102
      %p104 = scmp.ne.s32.totalorder %s95, %s96
      %p105 = scmp.eq.s32.totalorder %s22, 0
      %p106 = por %p104, %p105
      %p107 = scmp.ne.s32.totalorder %s95, %s96
      %p108 = scmp.eq.s32.totalorder %s23, 1
      %p109 = por %p107, %p108
      %p111 = scmp.ne.s32.totalorder %s96, %s110
      %p112 = scmp.eq.s32.totalorder %s23, 0
      %p113 = por %p111, %p112
      %s115 = sadd.s32 %s114, 1
      %p118 = scmp.eq.s32.totalorder %s17, 1
      %p119 = scmp.ne.s32.totalorder %s114, %s116
      %p120 = scmp.eq.s32.totalorder %s17, 0
      %p121 = por %p119, %p120
      %p122 = scmp.ne.s32.totalorder %s114, %s116
      %p123 = scmp.eq.s32.totalorder %s22, 1
      %p124 = por %p122, %p123
      %p125 = scmp.ne.s32.totalorder %s116, %s117
      %p126 = scmp.eq.s32.totalorder %s22, 0
      %p127 = por %p125, %p126
      %p128 = scmp.ne.s32.totalorder %s116, %s117
      %p129 = scmp.eq.s32.totalorder %s23, 1
      %p130 = por %p128, %p129
      %p132 = scmp.ne.s32.totalorder %s117, %s131
      %p133 = scmp.eq.s32.totalorder %s23, 0
      %p134 = por %p132, %p133
      %s136 = sadd.s32 %s135, 1
      %p139 = scmp.eq.s32.totalorder %s17, 1
      %p140 = scmp.ne.s32.totalorder %s135, %s137
      %p141 = scmp.eq.s32.totalorder %s17, 0
      %p142 = por %p140, %p141
      %p143 = scmp.ne.s32.totalorder %s135, %s137
      %p144 = scmp.eq.s32.totalorder %s22, 1
      %p145 = por %p143, %p144
      %p146 = scmp.ne.s32.totalorder %s137, %s138
      %p147 = scmp.eq.s32.totalorder %s22, 0
      %p148 = por %p146, %p147
      %p149 = scmp.ne.s32.totalorder %s137, %s138
      %p150 = scmp.eq.s32.totalorder %s23, 1
      %p151 = por %p149, %p150
      %p153 = scmp.ne.s32.totalorder %s138, %s152
      %p154 = scmp.eq.s32.totalorder %s23, 0
      %p155 = por %p153, %p154
      %s157 = sadd.s32 %s156, 1
      %p160 = scmp.eq.s32.totalorder %s17, 1
      %p161 = scmp.ne.s32.totalorder %s156, %s158
      %p162 = scmp.eq.s32.totalorder %s17, 0
      %p163 = por %p161, %p162
      %p164 = scmp.ne.s32.totalorder %s156, %s158
      %p165 = scmp.eq.s32.totalorder %s22, 1
      %p166 = por %p164, %p165
      %p167 = scmp.ne.s32.totalorder %s158, %s159
      %p168 = scmp.eq.s32.totalorder %s22, 0
      %p169 = por %p167, %p168
      %p170 = scmp.ne.s32.totalorder %s158, %s159
      %p171 = scmp.eq.s32.totalorder %s23, 1
      %p172 = por %p170, %p171
      %p174 = scmp.ne.s32.totalorder %s159, %s173
      %p175 = scmp.eq.s32.totalorder %s23, 0
      %p176 = por %p174, %p175
      %s178 = sadd.s32 %s177, 1
      %p181 = scmp.eq.s32.totalorder %s17, 1
      %p182 = scmp.ne.s32.totalorder %s177, %s179
      %p183 = scmp.eq.s32.totalorder %s17, 0
      %p184 = por %p182, %p183
      %p185 = scmp.ne.s32.totalorder %s177, %s179
      %p186 = scmp.eq.s32.totalorder %s22, 1
      %p187 = por %p185, %p186
      %p188 = scmp.ne.s32.totalorder %s179, %s180
      %p189 = scmp.eq.s32.totalorder %s22, 0
      %p190 = por %p188, %p189
      %p191 = scmp.ne.s32.totalorder %s179, %s180
      %p192 = scmp.eq.s32.totalorder %s23, 1
      %p193 = por %p191, %p192
      %p195 = scmp.ne.s32.totalorder %s180, %s194
      %p196 = scmp.eq.s32.totalorder %s23, 0
      %p197 = por %p195, %p196
      %s198 = ssub.s32 %s17, %s24
      %p199 = scmp.eq.s32.totalorder %s198, 0
      %s201 = sadd.s32 %s200, 1
      %s202 = scalar_select %p199, %s200, %s201
      %p205 = pneg %p199
      %p206 = scmp.eq.s32.totalorder %s17, 1
      %p207 = por %p205, %p206
      %p208 = scmp.ne.s32.totalorder %s200, %s203
      %p209 = scmp.eq.s32.totalorder %s17, 0
      %p210 = por %p208, %p209
      %p211 = scmp.ne.s32.totalorder %s200, %s203
      %p212 = scmp.eq.s32.totalorder %s22, 1
      %p213 = por %p211, %p212
      %p214 = scmp.ne.s32.totalorder %s203, %s204
      %p215 = scmp.eq.s32.totalorder %s22, 0
      %p216 = por %p214, %p215
      %p217 = scmp.ne.s32.totalorder %s203, %s204
      %p218 = scmp.eq.s32.totalorder %s23, 1
      %p219 = por %p217, %p218
      %p221 = scmp.ne.s32.totalorder %s204, %s220
      %p222 = scmp.eq.s32.totalorder %s23, 0
      %p223 = por %p221, %p222
      %p224 = scmp.le.s32.totalorder 1, %s17
      %p225 = scmp.lt.s32.totalorder %s17, 3
      %p226 = pnand %p224, %p225
      %p227 = pneg %p226
      // Predicated region
      $region9: #{tpu_custom_call.1} parent=5 // pred_check
        _
      $region10: #{tpu_custom_call.1} parent=5 // pred_check_branch
        %229 = sbr.rel (%p226) target = $region12
      $region11: #{tpu_custom_call.1} parent=5 // pred_region
        %s230 = ssub.s32 %s17, 1
        // Predicated region
        $region13: #{tpu_custom_call.1} parent=11 // pred_check
          %p231 = pneg %p64
        $region14: #{tpu_custom_call.1} parent=11 // pred_check_branch
          %233 = sbr.rel (%p231) target = $region16
        $region15: #{tpu_custom_call.1} parent=11 // pred_region
          _
        $region16: #{tpu_custom_call.1} parent=11 // pred_fallthru
          _
        // Predicated region
        $region17: #{tpu_custom_call.1} parent=11 // pred_check
          %p234 = pneg %p85
        $region18: #{tpu_custom_call.1} parent=11 // pred_check_branch
          %236 = sbr.rel (%p234) target = $region20
        $region19: #{tpu_custom_call.1} parent=11 // pred_region
          _
        $region20: #{tpu_custom_call.1} parent=11 // pred_fallthru
          _
        // Predicated region
        $region21: #{tpu_custom_call.1} parent=11 // pred_check
          %p237 = pneg %p106
        $region22: #{tpu_custom_call.1} parent=11 // pred_check_branch
          %239 = sbr.rel (%p237) target = $region24
        $region23: #{tpu_custom_call.1} parent=11 // pred_region
          _
        $region24: #{tpu_custom_call.1} parent=11 // pred_fallthru
          _
        // Predicated region
        $region25: #{tpu_custom_call.1} parent=11 // pred_check
          %p240 = pneg %p127
        $region26: #{tpu_custom_call.1} parent=11 // pred_check_branch
          %242 = sbr.rel (%p240) target = $region28
        $region27: #{tpu_custom_call.1} parent=11 // pred_region
          _
        $region28: #{tpu_custom_call.1} parent=11 // pred_fallthru
          _
        // Predicated region
        $region29: #{tpu_custom_call.1} parent=11 // pred_check
          %p243 = pneg %p148
        $region30: #{tpu_custom_call.1} parent=11 // pred_check_branch
          %245 = sbr.rel (%p243) target = $region32
        $region31: #{tpu_custom_call.1} parent=11 // pred_region
          _
        $region32: #{tpu_custom_call.1} parent=11 // pred_fallthru
          _
        // Predicated region
        $region33: #{tpu_custom_call.1} parent=11 // pred_check
          %p246 = pneg %p169
        $region34: #{tpu_custom_call.1} parent=11 // pred_check_branch
          %248 = sbr.rel (%p246) target = $region36
        $region35: #{tpu_custom_call.1} parent=11 // pred_region
          _
        $region36: #{tpu_custom_call.1} parent=11 // pred_fallthru
          _
        // Predicated region
        $region37: #{tpu_custom_call.1} parent=11 // pred_check
          %p249 = pneg %p190
        $region38: #{tpu_custom_call.1} parent=11 // pred_check_branch
          %251 = sbr.rel (%p249) target = $region40
        $region39: #{tpu_custom_call.1} parent=11 // pred_region
          _
        $region40: #{tpu_custom_call.1} parent=11 // pred_fallthru
          _
      $region12: #{tpu_custom_call.1} parent=5 // pred_fallthru
        _
      %p252 = scmp.lt.s32.totalorder %s17, 2
      // Predicated region
      $region41: #{tpu_custom_call.1} parent=5 // pred_check
        %p253 = pneg %p252
      $region42: #{tpu_custom_call.1} parent=5 // pred_check_branch
        %255 = sbr.rel (%p253) target = $region44
      $region43: #{tpu_custom_call.1} parent=5 // pred_region
        // Predicated region
        $region45: #{tpu_custom_call.1} parent=43 // pred_check
          %p256 = pneg %p37
        $region46: #{tpu_custom_call.1} parent=43 // pred_check_branch
          %258 = sbr.rel (%p256) target = $region48
        $region47: #{tpu_custom_call.1} parent=43 // pred_region
          %p259 = scmp.lt.s32.totalorder %s17, 1
          %s260 = scalar_select %p259, %s17, 1
          %s261 = smul.addr %s260, 3
          %s262 = smul.addr %s261, 4
          %s263 = scalar_lea.vmem %s0, %s262
        $region48: #{tpu_custom_call.1} parent=43 // pred_fallthru
          _
      $region44: #{tpu_custom_call.1} parent=5 // pred_fallthru
        _
      %p264 = scmp.le.s32.totalorder 1, %s17
      %p265 = scmp.lt.s32.totalorder %s17, 3
      %p266 = pnand %p264, %p265
      %p267 = pneg %p266
      // Predicated region
      $region49: #{tpu_custom_call.1} parent=5 // pred_check
        _
      $region50: #{tpu_custom_call.1} parent=5 // pred_check_branch
        %269 = sbr.rel (%p266) target = $region52
      $region51: #{tpu_custom_call.1} parent=5 // pred_region
        %s270 = ssub.s32 %s17, 1
        %p271 = scmp.lt.s32.totalorder %s22, 1
        %s272 = scalar_select %p271, %s22, 1
        %s273 = smul.addr %s272, 3
        %s274 = smul.addr %s273, 4
        %s275 = scalar_lea.vmem %s0, %s274
        %p276 = pneg %p43
        %p277 = pneg %p40
        %p278 = pneg %p64
        %p279 = pneg %p61
        %p280 = pneg %p85
        %p281 = pneg %p82
        %p282 = pneg %p106
        %p283 = pneg %p103
        %p284 = pneg %p127
        %p285 = pneg %p124
        %p286 = pneg %p148
        %p287 = pneg %p145
        %p288 = pneg %p169
        %p289 = pneg %p166
        %p290 = pneg %p190
        %p291 = pneg %p187
        %p292 = pneg %p216
        %p293 = pneg %p213
        %s294 = sand.u32 %s203, 1
        %s295 = scalar_lea.sflag [#allocation4], %s294
        %s296 = sand.u32 %s203, 1
        %s297 = smul.addr %s296, 48
        %s298 = scalar_lea.vmem [#allocation3], %s297
        %p299 = scmp.lt.s32.totalorder %s22, 1
        %s300 = scalar_select %p299, %s22, 1
        %s301 = smul.addr %s300, 3
        %s302 = smul.addr %s301, 4
        %s303 = scalar_lea.vmem %s0, %s302
        %v305 = vld [vmem:[%s1] sm:$0x7]
        %v306 = vld [vmem:[%s2] sm:$0xf]
        %v307 = vld [vmem:[%s5] sm:$0xf]
        %v308 = vld [vmem:[%s5 + $0x4] sm:$0xf]
        %v309 = vld [vmem:[%s3] sm:$0xff]
        %v310 = vld [vmem:[%s4] sm:$0xff]
        %v311 = vld [vmem:[%s6] sm:$0xff]
        %v312 = vld [vmem:[%s6 + $0x8] sm:$0xff]
        %v313 = vld [vmem:[%s7] sm:$0xff]
        %v314 = vld [vmem:[%s7 + $0x8] sm:$0xff]
        %v315 = vld [vmem:[%s303] sm:$0xff]
        %v316 = vld [vmem:[%s303 + $0x8] sm:$0xf]
        %v319 = vunpack.c.l.b16 %v315
        %v320 = vunpack.c.h.b16 %v315
        %v321 = vunpack.c.l.b16 %v316
        %v322 = vpack.c.b16 %v319, %v319
        %v323 = vpack.c.b16 %v320, %v320
        %v324 = vpack.c.b16 %v321, %v321
        %vm325 = vcmask 64512
        %v327 = vsel %vm325, %v306, 0
        %vm329 = vcmask 1043456
        %v331 = vsel %vm329, %v322, 0
        %v334 = vsel %vm329, %v323, 0
        %v337 = vsel %vm329, %v324, 0
        %339 = vmatprep.subr.bf16.mxu0 %v334
        %340 = vmatpush1.bf16.msra.mxu0 %v331
        %341 = vmatprep.subr.bf16.mxu0 0
        %342 = vmatpush1.bf16.msra.mxu0 0
        %343 = vmatprep.subr.bf16.mxu0 0
        %344 = vmatpush1.bf16.msra.mxu0 0
        %345 = vmatprep.subr.bf16.mxu0 0
        %346 = vmatpush1.bf16.msra.mxu0 0
        %347 = vmatprep.subr.bf16.mxu0 0
        %348 = vmatpush1.bf16.msra.mxu0 0
        %349 = vmatprep.subr.bf16.mxu0 0
        %350 = vmatpush1.bf16.msra.mxu0 0
        %351 = vmatprep.subr.bf16.mxu0 0
        %352 = vmatpush1.bf16.msra.mxu0 0
        %353 = vmatprep.subr.bf16.mxu0 0
        %354 = vmatpush1.bf16.msra.mxu0 0
        %355 = vmatprep.subr.bf16.mxu0 0
        %356 = vmatpush1.bf16.msra.mxu0 0
        %357 = vmatprep.subr.bf16.mxu0 0
        %358 = vmatpush1.bf16.msra.mxu0 0
        %359 = vmatprep.subr.bf16.mxu0 0
        %360 = vmatpush1.bf16.msra.mxu0 0
        %361 = vmatprep.subr.bf16.mxu0 0
        %362 = vmatpush1.bf16.msra.mxu0 0
        %363 = vmatprep.subr.bf16.mxu0 0
        %364 = vmatpush1.bf16.msra.mxu0 0
        %365 = vmatprep.subr.bf16.mxu0 0
        %366 = vmatpush1.bf16.msra.mxu0 0
        %367 = vmatprep.subr.bf16.mxu0 0
        %368 = vmatpush1.bf16.msra.mxu0 0
        %369 = vmatprep.subr.bf16.mxu0 0
        %370 = vmatpush1.bf16.msra.mxu0 0
        %371 = vmatprep.mubr.bf16.mxu0 0
        %372 = vmatmul.mubr.bf16.gmra.mrb[0].mxu0 %v327
        %v373 = vpop.f32.mrb[0].mxu0
        %v374 = vadd.f32 0.0, %v373
        %v375 = vpop.f32.mrb[0].mxu0
        %v376 = vadd.f32 0.0, %v375
        %v377 = vpop.f32.mrb[0].mxu0
        %v378 = vpop.f32.mrb[0].mxu0
        %379 = vdwg.mxu0
        %380 = vmatprep.subr.bf16.mxu0 0
        %381 = vmatpush1.bf16.msra.mxu0 %v337
        %382 = vmatprep.subr.bf16.mxu0 0
        %383 = vmatpush1.bf16.msra.mxu0 0
        %384 = vmatprep.subr.bf16.mxu0 0
        %385 = vmatpush1.bf16.msra.mxu0 0
        %386 = vmatprep.subr.bf16.mxu0 0
        %387 = vmatpush1.bf16.msra.mxu0 0
        %388 = vmatprep.subr.bf16.mxu0 0
        %389 = vmatpush1.bf16.msra.mxu0 0
        %390 = vmatprep.subr.bf16.mxu0 0
        %391 = vmatpush1.bf16.msra.mxu0 0
        %392 = vmatprep.subr.bf16.mxu0 0
        %393 = vmatpush1.bf16.msra.mxu0 0
        %394 = vmatprep.subr.bf16.mxu0 0
        %395 = vmatpush1.bf16.msra.mxu0 0
        %396 = vmatprep.subr.bf16.mxu0 0
        %397 = vmatpush1.bf16.msra.mxu0 0
        %398 = vmatprep.subr.bf16.mxu0 0
        %399 = vmatpush1.bf16.msra.mxu0 0
        %400 = vmatprep.subr.bf16.mxu0 0
        %401 = vmatpush1.bf16.msra.mxu0 0
        %402 = vmatprep.subr.bf16.mxu0 0
        %403 = vmatpush1.bf16.msra.mxu0 0
        %404 = vmatprep.subr.bf16.mxu0 0
        %405 = vmatpush1.bf16.msra.mxu0 0
        %406 = vmatprep.subr.bf16.mxu0 0
        %407 = vmatpush1.bf16.msra.mxu0 0
        %408 = vmatprep.subr.bf16.mxu0 0
        %409 = vmatpush1.bf16.msra.mxu0 0
        %410 = vmatprep.subr.bf16.mxu0 0
        %411 = vmatpush1.bf16.msra.mxu0 0
        %412 = vmatprep.mubr.bf16.mxu0 0
        %413 = vmatmul.mubr.bf16.gmra.mrb[0].mxu0 %v327
        %v414 = vpop.f32.mrb[0].mxu0
        %v415 = vadd.f32 0.0, %v414
        %v416 = vpop.f32.mrb[0].mxu0
        %v417 = vpop.f32.mrb[0].mxu0
        %v418 = vpop.f32.mrb[0].mxu0
        %419 = vdwg.mxu0
        %421 = vset.pattern.permute.xlu0 0
        %422 = vperm.xlu0 %421, %v309
        %v423 = vpop.permute.xlu0 %422
        %v425 = vmul.f32 %v374, %v423
        %v426 = vmul.f32 %v376, %v423
        %v427 = vmul.f32 %v415, %v423
        %429 = vset.pattern.permute.xlu0 0
        %430 = vperm.xlu0 %429, %v310
        %v431 = vpop.permute.xlu0 %430
        %v433 = vadd.f32 %v425, %v431
        %v434 = vadd.f32 %v426, %v431
        %v435 = vadd.f32 %v427, %v431
        %v436 = vmax.f32 %v433, 0.0
        %v437 = vmax.f32 %v434, 0.0
        %v438 = vmax.f32 %v435, 0.0
        %v440 = vlaneseq
        %v441 = vshrl.u32 %v440, 7
        %v442 = vsub.s32 0, %v441
        %v443 = vrot.slane %v305, %v442
        %v444 = vlaneseq
        %v445 = vshrl.u32 %v444, 7
        %v446 = vsub.s32 1, %v445
        %v447 = vrot.slane %v305, %v446
        %v448 = vlaneseq
        %v449 = vshrl.u32 %v448, 7
        %v450 = vsub.s32 2, %v449
        %v451 = vrot.slane %v305, %v450
        %v455 = vmul.f32 %v436, %v443
        %v456 = vmul.f32 %v437, %v447
        %v457 = vmul.f32 %v438, %v451
        %v458 = vpack.c.bf16 %v455, %v455
        %v459 = vpack.c.bf16 %v456, %v456
        %v460 = vpack.c.bf16 %v457, %v457
        %v464 = vunpack.c.l.b16 %v458
        %v465 = vunpack.c.l.b16 %v459
        %v466 = vunpack.c.l.b16 %v460
        %v467 = vpack.c.b16 %v465, %v464
        %v468 = vpack.c.b16 %v466, %v466
        %471 = vst [vmem:[#allocation2] sm:$0xff] %v467
        %vm472 = vcmask 240640
        %473 = vst.msk [vmem:[#allocation2 + $0x8] sm:$0xf] %vm472, %v468
        %474 = vrot.lane.b32.xlu0 %v467, 127
        %v475 = vpop.permute.xlu0 %474
        %476 = vrot.lane.b32.xlu0 %v468, 127
        %v477 = vpop.permute.xlu0 %476
        %v478 = vrot.slane %v475, 4
        %v479 = vrot.slane %v477, 4
        %vm480 = vcmask 1043456
        %v481 = vsel %vm480, %v478, %v479
        %vm482 = vcmask 1039360
        %v483 = vsel %vm482, %v475, %v481
        %486 = vst [vmem:[#allocation2 + $0xc] sm:$0xff] %v483
        %487 = vst.msk [vmem:[#allocation2 + $0x14] sm:$0xf] %vm472, %v477
        %488 = vrot.lane.b32.xlu0 %v467, 126
        %v489 = vpop.permute.xlu0 %488
        %490 = vrot.lane.b32.xlu0 %v468, 126
        %v491 = vpop.permute.xlu0 %490
        %v492 = vrot.slane %v489, 4
        %v493 = vrot.slane %v491, 4
        %v494 = vsel %vm480, %v492, %v493
        %vm495 = vcmask 1031168
        %v496 = vsel %vm495, %v489, %v494
        %499 = vst [vmem:[#allocation2 + $0x18] sm:$0xff] %v496
        %500 = vst.msk [vmem:[#allocation2 + $0x20] sm:$0xf] %vm472, %v491
        %501 = vrot.lane.b32.xlu0 %v467, 110
        %v502 = vpop.permute.xlu0 %501
        %503 = vrot.lane.b32.xlu0 %v468, 110
        %v504 = vpop.permute.xlu0 %503
        %v505 = vrot.slane %v502, 4
        %v506 = vrot.slane %v504, 4
        %v507 = vsel %vm480, %v505, %v506
        %vm508 = vcmask 900096
        %v509 = vsel %vm508, %v502, %v507
        %512 = vst [vmem:[#allocation2 + $0x24] sm:$0xff] %v509
        %513 = vst.msk [vmem:[#allocation2 + $0x2c] sm:$0xf] %vm472, %v504
        %514 = vrot.lane.b32.xlu0 %v467, 109
        %v515 = vpop.permute.xlu0 %514
        %516 = vrot.lane.b32.xlu0 %v468, 109
        %v517 = vpop.permute.xlu0 %516
        %v518 = vrot.slane %v515, 4
        %v519 = vrot.slane %v517, 4
        %v520 = vsel %vm480, %v518, %v519
        %vm521 = vcmask 891904
        %v522 = vsel %vm521, %v515, %v520
        %525 = vst [vmem:[#allocation2 + $0x30] sm:$0xff] %v522
        %526 = vst.msk [vmem:[#allocation2 + $0x38] sm:$0xf] %vm472, %v517
        %527 = vrot.lane.b32.xlu0 %v467, 108
        %v528 = vpop.permute.xlu0 %527
        %529 = vrot.lane.b32.xlu0 %v468, 108
        %v530 = vpop.permute.xlu0 %529
        %v531 = vrot.slane %v528, 4
        %v532 = vrot.slane %v530, 4
        %v533 = vsel %vm480, %v531, %v532
        %vm534 = vcmask 883712
        %v535 = vsel %vm534, %v528, %v533
        %538 = vst [vmem:[#allocation2 + $0x3c] sm:$0xff] %v535
        %539 = vst.msk [vmem:[#allocation2 + $0x44] sm:$0xf] %vm472, %v530
        %540 = vrot.lane.b32.xlu0 %v467, 92
        %v541 = vpop.permute.xlu0 %540
        %542 = vrot.lane.b32.xlu0 %v468, 92
        %v543 = vpop.permute.xlu0 %542
        %v544 = vrot.slane %v541, 4
        %v545 = vrot.slane %v543, 4
        %v546 = vsel %vm480, %v544, %v545
        %vm547 = vcmask 752640
        %v548 = vsel %vm547, %v541, %v546
        %551 = vst [vmem:[#allocation2 + $0x48] sm:$0xff] %v548
        %552 = vst.msk [vmem:[#allocation2 + $0x50] sm:$0xf] %vm472, %v543
        %553 = vrot.lane.b32.xlu0 %v467, 91
        %v554 = vpop.permute.xlu0 %553
        %555 = vrot.lane.b32.xlu0 %v468, 91
        %v556 = vpop.permute.xlu0 %555
        %v557 = vrot.slane %v554, 4
        %v558 = vrot.slane %v556, 4
        %v559 = vsel %vm480, %v557, %v558
        %vm560 = vcmask 744448
        %v561 = vsel %vm560, %v554, %v559
        %564 = vst [vmem:[#allocation2 + $0x54] sm:$0xff] %v561
        %565 = vst.msk [vmem:[#allocation2 + $0x5c] sm:$0xf] %vm472, %v556
        %566 = vrot.lane.b32.xlu0 %v467, 90
        %v567 = vpop.permute.xlu0 %566
        %568 = vrot.lane.b32.xlu0 %v468, 90
        %v569 = vpop.permute.xlu0 %568
        %v570 = vrot.slane %v567, 4
        %v571 = vrot.slane %v569, 4
        %v572 = vsel %vm480, %v570, %v571
        %vm573 = vcmask 736256
        %v574 = vsel %vm573, %v567, %v572
        %577 = vst [vmem:[#allocation2 + $0x60] sm:$0xff] %v574
        %578 = vst.msk [vmem:[#allocation2 + $0x68] sm:$0xf] %vm472, %v569
        %v579 = vld [vmem:[#allocation2] sm:$0xff]
        %v580 = vld [vmem:[#allocation2 + $0x8] sm:$0xf]
        %v581 = vld [vmem:[#allocation2 + $0xc] sm:$0xff]
        %v582 = vld [vmem:[#allocation2 + $0x14] sm:$0xf]
        %v583 = vld [vmem:[#allocation2 + $0x18] sm:$0xff]
        %v584 = vld [vmem:[#allocation2 + $0x20] sm:$0xf]
        %v585 = vld [vmem:[#allocation2 + $0x24] sm:$0xff]
        %v586 = vld [vmem:[#allocation2 + $0x2c] sm:$0xf]
        %v587 = vld [vmem:[#allocation2 + $0x30] sm:$0xff]
        %v588 = vld [vmem:[#allocation2 + $0x38] sm:$0xf]
        %v589 = vld [vmem:[#allocation2 + $0x3c] sm:$0xff]
        %v590 = vld [vmem:[#allocation2 + $0x44] sm:$0xf]
        %v591 = vld [vmem:[#allocation2 + $0x48] sm:$0xff]
        %v592 = vld [vmem:[#allocation2 + $0x50] sm:$0xf]
        %v593 = vld [vmem:[#allocation2 + $0x54] sm:$0xff]
        %v594 = vld [vmem:[#allocation2 + $0x5c] sm:$0xf]
        %v595 = vld [vmem:[#allocation2 + $0x60] sm:$0xff]
        %v596 = vld [vmem:[#allocation2 + $0x68] sm:$0xf]
        %v599 = vunpack.c.l.b16 %v307
        %v600 = vunpack.c.l.b16 %v308
        %v601 = vpack.c.b16 %v600, %v599
        %v620 = vunpack.c.l.b16 %v579
        %v621 = vunpack.c.h.b16 %v579
        %v622 = vunpack.c.l.b16 %v580
        %v623 = vunpack.c.l.b16 %v581
        %v624 = vunpack.c.h.b16 %v581
        %v625 = vunpack.c.l.b16 %v582
        %v626 = vunpack.c.l.b16 %v583
        %v627 = vunpack.c.h.b16 %v583
        %v628 = vunpack.c.l.b16 %v584
        %v629 = vunpack.c.l.b16 %v585
        %v630 = vunpack.c.h.b16 %v585
        %v631 = vunpack.c.l.b16 %v586
        %v632 = vunpack.c.l.b16 %v587
        %v633 = vunpack.c.h.b16 %v587
        %v634 = vunpack.c.l.b16 %v588
        %v635 = vunpack.c.l.b16 %v589
        %v636 = vunpack.c.h.b16 %v589
        %v637 = vunpack.c.l.b16 %v590
        %v638 = vunpack.c.l.b16 %v591
        %v639 = vunpack.c.h.b16 %v591
        %v640 = vunpack.c.l.b16 %v592
        %v641 = vunpack.c.l.b16 %v593
        %v642 = vunpack.c.h.b16 %v593
        %v643 = vunpack.c.l.b16 %v594
        %v644 = vunpack.c.l.b16 %v595
        %v645 = vunpack.c.h.b16 %v595
        %v646 = vunpack.c.l.b16 %v596
        %v647 = vpack.c.b16 %v623, %v620
        %v648 = vpack.c.b16 %v624, %v621
        %v649 = vpack.c.b16 %v625, %v622
        %v650 = vpack.c.b16 %v629, %v626
        %v651 = vpack.c.b16 %v630, %v627
        %v652 = vpack.c.b16 %v631, %v628
        %v653 = vpack.c.b16 %v635, %v632
        %v654 = vpack.c.b16 %v636, %v633
        %v655 = vpack.c.b16 %v637, %v634
        %v656 = vpack.c.b16 %v641, %v638
        %v657 = vpack.c.b16 %v642, %v639
        %v658 = vpack.c.b16 %v643, %v640
        %v659 = vpack.c.b16 %v644, %v644
        %v660 = vpack.c.b16 %v645, %v645
        %v661 = vpack.c.b16 %v646, %v646
        %vm674 = vcmask 588800
        %v676 = vsel %vm674, %v601, 0
        %v679 = vsel %vm329, %v659, 0
        %v682 = vsel %vm329, %v660, 0
        %v685 = vsel %vm329, %v661, 0
        %687 = vmatprep.subr.bf16.mxu0 %v648
        %688 = vmatpush1.bf16.msra.mxu0 %v647
        %689 = vmatprep.subr.bf16.mxu0 %v651
        %690 = vmatpush1.bf16.msra.mxu0 %v650
        %691 = vmatprep.subr.bf16.mxu0 %v654
        %692 = vmatpush1.bf16.msra.mxu0 %v653
        %693 = vmatprep.subr.bf16.mxu0 %v657
        %694 = vmatpush1.bf16.msra.mxu0 %v656
        %695 = vmatprep.subr.bf16.mxu0 %v682
        %696 = vmatpush1.bf16.msra.mxu0 %v679
        %697 = vmatprep.subr.bf16.mxu0 0
        %698 = vmatpush1.bf16.msra.mxu0 0
        %699 = vmatprep.subr.bf16.mxu0 0
        %700 = vmatpush1.bf16.msra.mxu0 0
        %701 = vmatprep.subr.bf16.mxu0 0
        %702 = vmatpush1.bf16.msra.mxu0 0
        %703 = vmatprep.subr.bf16.mxu0 0
        %704 = vmatpush1.bf16.msra.mxu0 0
        %705 = vmatprep.subr.bf16.mxu0 0
        %706 = vmatpush1.bf16.msra.mxu0 0
        %707 = vmatprep.subr.bf16.mxu0 0
        %708 = vmatpush1.bf16.msra.mxu0 0
        %709 = vmatprep.subr.bf16.mxu0 0
        %710 = vmatpush1.bf16.msra.mxu0 0
        %711 = vmatprep.subr.bf16.mxu0 0
        %712 = vmatpush1.bf16.msra.mxu0 0
        %713 = vmatprep.subr.bf16.mxu0 0
        %714 = vmatpush1.bf16.msra.mxu0 0
        %715 = vmatprep.subr.bf16.mxu0 0
        %716 = vmatpush1.bf16.msra.mxu0 0
        %717 = vmatprep.subr.bf16.mxu0 0
        %718 = vmatpush1.bf16.msra.mxu0 0
        %719 = vmatprep.mubr.bf16.mxu0 0
        %720 = vmatmul.mubr.bf16.gmra.mrb[0].mxu0 %v676
        %v721 = vpop.f32.mrb[0].mxu0
        %v722 = vadd.f32 0.0, %v721
        %v723 = vpop.f32.mrb[0].mxu0
        %v724 = vadd.f32 0.0, %v723
        %v725 = vpop.f32.mrb[0].mxu0
        %v726 = vadd.f32 0.0, %v725
        %v727 = vpop.f32.mrb[0].mxu0
        %v728 = vadd.f32 0.0, %v727
        %729 = vdwg.mxu0
        %730 = vmatprep.subr.bf16.mxu0 0
        %731 = vmatpush1.bf16.msra.mxu0 %v649
        %732 = vmatprep.subr.bf16.mxu0 0
        %733 = vmatpush1.bf16.msra.mxu0 %v652
        %734 = vmatprep.subr.bf16.mxu0 0
        %735 = vmatpush1.bf16.msra.mxu0 %v655
        %736 = vmatprep.subr.bf16.mxu0 0
        %737 = vmatpush1.bf16.msra.mxu0 %v658
        %738 = vmatprep.subr.bf16.mxu0 0
        %739 = vmatpush1.bf16.msra.mxu0 %v685
        %740 = vmatprep.subr.bf16.mxu0 0
        %741 = vmatpush1.bf16.msra.mxu0 0
        %742 = vmatprep.subr.bf16.mxu0 0
        %743 = vmatpush1.bf16.msra.mxu0 0
        %744 = vmatprep.subr.bf16.mxu0 0
        %745 = vmatpush1.bf16.msra.mxu0 0
        %746 = vmatprep.subr.bf16.mxu0 0
        %747 = vmatpush1.bf16.msra.mxu0 0
        %748 = vmatprep.subr.bf16.mxu0 0
        %749 = vmatpush1.bf16.msra.mxu0 0
        %750 = vmatprep.subr.bf16.mxu0 0
        %751 = vmatpush1.bf16.msra.mxu0 0
        %752 = vmatprep.subr.bf16.mxu0 0
        %753 = vmatpush1.bf16.msra.mxu0 0
        %754 = vmatprep.subr.bf16.mxu0 0
        %755 = vmatpush1.bf16.msra.mxu0 0
        %756 = vmatprep.subr.bf16.mxu0 0
        %757 = vmatpush1.bf16.msra.mxu0 0
        %758 = vmatprep.subr.bf16.mxu0 0
        %759 = vmatpush1.bf16.msra.mxu0 0
        %760 = vmatprep.subr.bf16.mxu0 0
        %761 = vmatpush1.bf16.msra.mxu0 0
        %762 = vmatprep.mubr.bf16.mxu0 0
        %763 = vmatmul.mubr.bf16.gmra.mrb[0].mxu0 %v676
        %v764 = vpop.f32.mrb[0].mxu0
        %v765 = vadd.f32 0.0, %v764
        %v766 = vpop.f32.mrb[0].mxu0
        %v767 = vpop.f32.mrb[0].mxu0
        %v768 = vadd.f32 0.0, %v767
        %v769 = vpop.f32.mrb[0].mxu0
        %770 = vdwg.mxu0
        %772 = vset.pattern.permute.xlu0 0
        %773 = vperm.xlu0 %772, %v311
        %v774 = vpop.permute.xlu0 %773
        %777 = vset.pattern.permute.xlu0 0
        %778 = vperm.xlu0 %777, %v312
        %v779 = vpop.permute.xlu0 %778
        %v781 = vmul.f32 %v722, %v774
        %v782 = vmul.f32 %v724, %v774
        %v783 = vmul.f32 %v765, %v774
        %v784 = vmul.f32 %v726, %v779
        %v785 = vmul.f32 %v728, %v779
        %v786 = vmul.f32 %v768, %v779
        %788 = vset.pattern.permute.xlu0 0
        %789 = vperm.xlu0 %788, %v313
        %v790 = vpop.permute.xlu0 %789
        %793 = vset.pattern.permute.xlu0 0
        %794 = vperm.xlu0 %793, %v314
        %v795 = vpop.permute.xlu0 %794
        %v797 = vadd.f32 %v781, %v790
        %v798 = vadd.f32 %v782, %v790
        %v799 = vadd.f32 %v783, %v790
        %v800 = vadd.f32 %v784, %v795
        %v801 = vadd.f32 %v785, %v795
        %v802 = vadd.f32 %v786, %v795
        %v803 = vmax.f32 %v797, 0.0
        %v804 = vmax.f32 %v798, 0.0
        %v805 = vmax.f32 %v799, 0.0
        %v806 = vmax.f32 %v800, 0.0
        %v807 = vmax.f32 %v801, 0.0
        %v808 = vmax.f32 %v802, 0.0
        %809 = vst [vmem:[%s298] sm:$0xff] %v803
        %810 = vst [vmem:[%s298 + $0x8] sm:$0xff] %v804
        %vm811 = vcmask 244736
        %812 = vst.msk [vmem:[%s298 + $0x10] sm:$0xff] %vm811, %v805
        %813 = vst [vmem:[%s298 + $0x18] sm:$0xff] %v806
        %814 = vst [vmem:[%s298 + $0x20] sm:$0xff] %v807
        %815 = vst.msk [vmem:[%s298 + $0x28] sm:$0xff] %vm811, %v808
        %s816 = sand.u32 %s203, 1
        %s817 = scalar_lea.sflag [#allocation4], %s816
        %s818 = sand.u32 %s203, 1
        %s819 = smul.addr %s818, 48
        %s820 = scalar_lea.vmem [#allocation3], %s819
        // Predicated region
        $region53: #{tpu_custom_call.1} parent=51 // pred_check
          %p821 = pneg %p213
        $region54: #{tpu_custom_call.1} parent=51 // pred_check_branch
          %823 = sbr.rel (%p821) target = $region56
        $region55: #{tpu_custom_call.1} parent=51 // pred_region
          %s825 = ssub.s32 768, 768
          %826 = vsyncadd %s817, %s825
          %s827 = smul.addr %s22, 6
          %s828 = smul.addr %s827, 128
          %s829 = scalar_lea.hbm %s8, %s828
          %s830 = sshll.u32 %s820, 4
          %s831 = int_to_ptr.vmem [resolvable:$true] %s830
          %836 = dma.vmem_to_hbm [thread:$0]  %s831, 768, %s829, %s817, 384, 384, 24
        $region56: #{tpu_custom_call.1} parent=51 // pred_fallthru
          _
      $region52: #{tpu_custom_call.1} parent=5 // pred_fallthru
        _
      %p837 = scmp.le.s32.totalorder 2, %s17
      // Predicated region
      $region57: #{tpu_custom_call.1} parent=5 // pred_check
        %p838 = pneg %p837
      $region58: #{tpu_custom_call.1} parent=5 // pred_check_branch
        %840 = sbr.rel (%p838) target = $region60
      $region59: #{tpu_custom_call.1} parent=5 // pred_region
        %s841 = ssub.s32 %s17, 2
        // Predicated region
        $region61: #{tpu_custom_call.1} parent=59 // pred_check
          %p842 = pneg %p219
        $region62: #{tpu_custom_call.1} parent=59 // pred_check_branch
          %844 = sbr.rel (%p842) target = $region64
        $region63: #{tpu_custom_call.1} parent=59 // pred_region
          %s845 = sand.u32 %s204, 1
          %s846 = scalar_lea.sflag [#allocation4], %s845
          %s847 = sand.u32 %s204, 1
          %s848 = smul.addr %s847, 48
          %s849 = scalar_lea.vmem [#allocation3], %s848
          %850 = dma.done %s846, 768
        $region64: #{tpu_custom_call.1} parent=59 // pred_fallthru
          _
      $region60: #{tpu_custom_call.1} parent=5 // pred_fallthru
        _
    $region6: #{tpu_custom_call.1} parent=1 // loop_footer
      %s21 = sadd.s32 1, %s17
    $region7: #{tpu_custom_call.1} parent=1 // loop_footer_branch
      %16 = sbr.rel target = $region3
    $region8: #{tpu_custom_call.1} parent=1 // loop_exit
      _
    %851 = vsyncpa [#allocation4], 1
    %s852 = scalar_lea.sflag [#allocation4], 1
    %853 = vsyncpa %s852, 1

</llo_original>
